<compile_context>
chip_gen: v6e
topology: v6e:2x2x1
jax: 0.10.0
libtpu: 0.0.40
codegen_flags: <defaults>
</compile_context>

<pallas_src>
import functools

import jax
import jax.numpy as jnp
from jax import lax
from jax.experimental import pallas as pl
from jax.experimental.pallas import tpu as pltpu


def _norm_softmax_loss_kernel(
    x_ref,          # (TM, M) input tile
    o_ref,          # (1, 1)  SMEM scalar output
    m_col_ref,      # (1, M)  VMEM: running column max
    l_col_ref,      # (1, M)  VMEM: running column sum(exp(s - m_col))
    dsum_ref,       # (1, 1)  VMEM: running sum of diag(s)
    rsum_ref,       # (1, 1)  VMEM: running sum of row-lse over valid rows (< d)
    *,
    inv_t,          # static: 1 / temperature
    tm,             # static: rows per tile
    d,              # static: min(N, M) — diagonal length / normalizer
):
    i = pl.program_id(0)
    nt = pl.num_programs(0)
    m = x_ref.shape[1]

    @pl.when(i == 0)
    def _init():
        m_col_ref[...] = jnp.full_like(m_col_ref, -1e30)
        l_col_ref[...] = jnp.zeros_like(l_col_ref)
        dsum_ref[...] = jnp.zeros_like(dsum_ref)
        rsum_ref[...] = jnp.zeros_like(rsum_ref)

    # Scaled logits for this row tile (bf16 input is cast per tile; mul by reciprocal).
    s = x_ref[...].astype(jnp.float32) * inv_t                      # (TM, M)

    # ---- row-wise logsumexp for this tile (stable) ----
    m_row = jnp.max(s, axis=1, keepdims=True)                       # (TM, 1)
    lse_row = m_row + jnp.log(jnp.sum(jnp.exp(s - m_row), axis=1, keepdims=True))

    # ---- online column-wise logsumexp carried across row tiles ----
    m_old = m_col_ref[...]                                          # (1, M)
    m_new = jnp.maximum(m_old, jnp.max(s, axis=0, keepdims=True))
    l_col_ref[...] = (
        l_col_ref[...] * jnp.exp(m_old - m_new)
        + jnp.sum(jnp.exp(s - m_new), axis=0, keepdims=True)
    )
    m_col_ref[...] = m_new

    # ---- accumulate sum(lse_row) and sum(diag(s)) over valid (global) rows < d ----
    r0 = i * tm
    row_ids = r0 + lax.broadcasted_iota(jnp.int32, (tm, 1), 0)      # global row index
    row_valid = row_ids < d                                         # (TM, 1)
    rsum_ref[...] += jnp.sum(jnp.where(row_valid, lse_row, 0.0))

    @pl.when(r0 < d)  # only tiles that intersect the diagonal do the (small) masked pick
    def _diag():
        col_ids = lax.broadcasted_iota(jnp.int32, (tm, m), 1)
        dmask = jnp.logical_and(col_ids == row_ids, row_valid)
        dsum_ref[...] += jnp.sum(jnp.where(dmask, s, 0.0))

    # ---- finalize on the last row tile ----
    @pl.when(i == nt - 1)
    def _finalize():
        lse_col = m_col_ref[...] + jnp.log(l_col_ref[...])          # (1, M)
        col_ids = lax.broadcasted_iota(jnp.int32, (1, m), 1)
        csum = jnp.sum(jnp.where(col_ids < d, lse_col, 0.0))        # sum lse_col[:d]
        dsum = jnp.sum(dsum_ref[...])                               # sum diag(s)
        rsum = jnp.sum(rsum_ref[...])                               # sum lse_row[:d]
        inv_d = 1.0 / float(d)
        # loss = -(dsum - rsum)/d - (dsum - csum)/d
        o_ref[0, 0] = (rsum - dsum) * inv_d + (csum - dsum) * inv_d


def norm_softmax_loss(x, temperature=0.05, block_rows=256):
    """x: (N, M) similarity matrix (f32 or bf16). Returns scalar f32 loss."""
    n, m = x.shape
    d = min(n, m)
    inv_t = 1.0 / float(temperature)

    # Row-tile size: single tile for small N, otherwise fixed TM with row padding so
    # the grid divides evenly.  Padded rows use a huge negative value so exp() -> 0
    # (no effect on the column logsumexp) and fall outside the valid-row range (< d).
    if n <= block_rows:
        tm = n
        x_p = x
    else:
        tm = block_rows
        pad = (-n) % tm
        if pad:
            fill = jnp.full((pad, m), -1e9, dtype=x.dtype)
            x_p = jnp.concatenate([x, fill], axis=0)
        else:
            x_p = x
    num_tiles = x_p.shape[0] // tm

    kernel = functools.partial(_norm_softmax_loss_kernel, inv_t=inv_t, tm=tm, d=d)

    grid_spec = pltpu.PrefetchScalarGridSpec(
        num_scalar_prefetch=0,
        grid=(num_tiles,),
        in_specs=[pl.BlockSpec((tm, m), lambda i: (i, 0))],
        out_specs=pl.BlockSpec((1, 1), lambda i: (0, 0), memory_space=pltpu.SMEM),
        scratch_shapes=[
            pltpu.VMEM((1, m), jnp.float32),   # running column max
            pltpu.VMEM((1, m), jnp.float32),   # running column sum-exp
            pltpu.VMEM((1, 1), jnp.float32),   # running sum diag(s)
            pltpu.VMEM((1, 1), jnp.float32),   # running sum lse_row (valid rows)
        ],
    )

    out = pl.pallas_call(
        kernel,
        out_shape=jax.ShapeDtypeStruct((1, 1), jnp.float32),
        grid_spec=grid_spec,
        compiler_params=pltpu.CompilerParams(
            dimension_semantics=("arbitrary",),       # carried state across row tiles
            vmem_limit_bytes=32 * 1024 * 1024,        # safe on v5e/v6e/v7x
        ),
    )(x_p)
    return out[0, 0]


def norm_softmax_loss_ref(x, temperature=0.05):
    """Pure-JAX reference matching the PyTorch module."""
    s = x.astype(jnp.float32) / temperature
    i_logsm = jax.nn.log_softmax(s, axis=1)
    j_logsm = jax.nn.log_softmax(s.T, axis=1)
    idiag = jnp.diag(i_logsm)
    jdiag = jnp.diag(j_logsm)
    return -(idiag.sum() / idiag.shape[0]) - (jdiag.sum() / jdiag.shape[0])


if __name__ == "__main__":
    key = jax.random.PRNGKey(0)

    def make_sim(k, n, m, h=32, dtype=jnp.float32):
        ka, kb = jax.random.split(k)
        a = jax.random.normal(ka, (n, h), dtype=jnp.float32)
        b = jax.random.normal(kb, (m, h), dtype=jnp.float32)
        a = a / jnp.linalg.norm(a, axis=-1, keepdims=True)
        b = b / jnp.linalg.norm(b, axis=-1, keepdims=True)
        return (a @ b.T).astype(dtype)  # (N, M) cosine similarities in [-1, 1]

    cases = [
        # (name,                         N,   M,   dtype,        block_rows)
        ("small square single tile",     8,   8,   jnp.float32,  256),
        ("multi-tile square",            384, 384, jnp.float32,  128),
        ("rectangular N > M",            256, 128, jnp.float32,  128),
        ("padded rows (N % TM != 0)",    200, 256, jnp.float32,  128),
        ("bf16 input",                   256, 256, jnp.bfloat16, 128),
    ]
    keys = jax.random.split(key, len(cases))
    for (name, n, m, dtype, br), k in zip(cases, keys):
        x = make_sim(k, n, m, dtype=dtype)
        got = norm_softmax_loss(x, temperature=0.05, block_rows=br)
        jax.block_until_ready(got)
        want = norm_softmax_loss_ref(x, temperature=0.05)
        assert jnp.allclose(got, want, rtol=1e-4, atol=1e-3), (name, got, want)

    print("KERNEL_OK")
</pallas_src>

<mosaic_0001>
module attributes {stable_mosaic.version = 11 : i64} {
  func.func @_norm_softmax_loss_kernel(%arg0: i32, %arg1: memref<8x8xf32, #tpu.memory_space<vmem>>, %arg2: memref<1x1xf32, #tpu.memory_space<smem>>, %arg3: memref<1x8xf32, #tpu.memory_space<vmem>>, %arg4: memref<1x8xf32, #tpu.memory_space<vmem>>, %arg5: memref<1x1xf32, #tpu.memory_space<vmem>>, %arg6: memref<1x1xf32, #tpu.memory_space<vmem>>) attributes {dimension_semantics = [#tpu.dimension_semantics<arbitrary>], iteration_bounds = array<i64: 1>, scalar_prefetch = 0 : i64, scratch_operands = 4 : i64, tpu.core_type = #tpu.core_type<tc>, window_params = [{transform_indices = @transform_0, window_bounds = array<i64: 8, 8>}, {transform_indices = @transform_1, window_bounds = array<i64: 1, 1>}]} {
    %c0_i32 = arith.constant 0 : i32
    %0 = arith.cmpi eq, %arg0, %c0_i32 : i32
    %1 = arith.extui %0 : i1 to i32
    %c0_i32_0 = arith.constant 0 : i32
    %2 = arith.cmpi ne, %1, %c0_i32_0 : i32
    scf.if %2 {
      %cst_25 = arith.constant -1.000000e+30 : f32
      %53 = vector.broadcast %cst_25 : f32 to vector<1x8xf32>
      %c0_26 = arith.constant 0 : index
      %c0_27 = arith.constant 0 : index
      %54 = vector.load %arg3[%c0_26, %c0_27] : memref<1x8xf32, #tpu.memory_space<vmem>>, vector<1x8xf32>
      tpu.vector_store %arg3[%c0_26, %c0_27], %53 {strides = array<i32>} : memref<1x8xf32, #tpu.memory_space<vmem>>, vector<1x8xf32>,
      %cst_28 = arith.constant 0.000000e+00 : f32
      %55 = vector.broadcast %cst_28 : f32 to vector<1x8xf32>
      %c0_29 = arith.constant 0 : index
      %c0_30 = arith.constant 0 : index
      %56 = vector.load %arg4[%c0_29, %c0_30] : memref<1x8xf32, #tpu.memory_space<vmem>>, vector<1x8xf32>
      tpu.vector_store %arg4[%c0_29, %c0_30], %55 {strides = array<i32>} : memref<1x8xf32, #tpu.memory_space<vmem>>, vector<1x8xf32>,
      %cst_31 = arith.constant 0.000000e+00 : f32
      %57 = vector.broadcast %cst_31 : f32 to vector<1x1xf32>
      %c0_32 = arith.constant 0 : index
      %c0_33 = arith.constant 0 : index
      %58 = vector.load %arg5[%c0_32, %c0_33] : memref<1x1xf32, #tpu.memory_space<vmem>>, vector<1x1xf32>
      tpu.vector_store %arg5[%c0_32, %c0_33], %57 {strides = array<i32>} : memref<1x1xf32, #tpu.memory_space<vmem>>, vector<1x1xf32>,
      %cst_34 = arith.constant 0.000000e+00 : f32
      %59 = vector.broadcast %cst_34 : f32 to vector<1x1xf32>
      %c0_35 = arith.constant 0 : index
      %c0_36 = arith.constant 0 : index
      %60 = vector.load %arg6[%c0_35, %c0_36] : memref<1x1xf32, #tpu.memory_space<vmem>>, vector<1x1xf32>
      tpu.vector_store %arg6[%c0_35, %c0_36], %59 {strides = array<i32>} : memref<1x1xf32, #tpu.memory_space<vmem>>, vector<1x1xf32>,
    } else {
    }
    %c0 = arith.constant 0 : index
    %c0_1 = arith.constant 0 : index
    %3 = vector.load %arg1[%c0, %c0_1] : memref<8x8xf32, #tpu.memory_space<vmem>>, vector<8x8xf32>
    %cst = arith.constant 2.000000e+01 : f32
    %4 = vector.broadcast %cst : f32 to vector<8x8xf32>
    %5 = arith.mulf %3, %4 : vector<8x8xf32>
    %cst_2 = arith.constant dense<0xFF800000> : vector<8xf32>
    %6 = vector.multi_reduction <maximumf>, %5, %cst_2 [1] : vector<8x8xf32> to vector<8xf32>
    %7 = vector.shape_cast %6 : vector<8xf32> to vector<8x1xf32>
    %8 = vector.broadcast %7 : vector<8x1xf32> to vector<8x8xf32>
    %9 = arith.subf %5, %8 : vector<8x8xf32>
    %10 = math.exp %9 : vector<8x8xf32>
    %cst_3 = arith.constant dense<0.000000e+00> : vector<8xf32>
    %11 = vector.multi_reduction <add>, %10, %cst_3 [1] : vector<8x8xf32> to vector<8xf32>
    %12 = vector.shape_cast %11 : vector<8xf32> to vector<8x1xf32>
    %13 = math.log %12 : vector<8x1xf32>
    %14 = arith.addf %7, %13 : vector<8x1xf32>
    %c0_4 = arith.constant 0 : index
    %c0_5 = arith.constant 0 : index
    %15 = vector.load %arg3[%c0_4, %c0_5] : memref<1x8xf32, #tpu.memory_space<vmem>>, vector<1x8xf32>
    %cst_6 = arith.constant dense<0xFF800000> : vector<8xf32>
    %16 = vector.multi_reduction <maximumf>, %5, %cst_6 [0] : vector<8x8xf32> to vector<8xf32>
    %17 = vector.shape_cast %16 : vector<8xf32> to vector<1x8xf32>
    %18 = arith.maximumf %15, %17 : vector<1x8xf32>
    %c0_7 = arith.constant 0 : index
    %c0_8 = arith.constant 0 : index
    %19 = vector.load %arg4[%c0_7, %c0_8] : memref<1x8xf32, #tpu.memory_space<vmem>>, vector<1x8xf32>
    %20 = arith.subf %15, %18 : vector<1x8xf32>
    %21 = math.exp %20 : vector<1x8xf32>
    %22 = arith.mulf %19, %21 : vector<1x8xf32>
    %23 = vector.broadcast %18 : vector<1x8xf32> to vector<8x8xf32>
    %24 = arith.subf %5, %23 : vector<8x8xf32>
    %25 = math.exp %24 : vector<8x8xf32>
    %cst_9 = arith.constant dense<0.000000e+00> : vector<8xf32>
    %26 = vector.multi_reduction <add>, %25, %cst_9 [0] : vector<8x8xf32> to vector<8xf32>
    %27 = vector.shape_cast %26 : vector<8xf32> to vector<1x8xf32>
    %28 = arith.addf %22, %27 : vector<1x8xf32>
    %c0_10 = arith.constant 0 : index
    %c0_11 = arith.constant 0 : index
    %29 = vector.load %arg4[%c0_10, %c0_11] : memref<1x8xf32, #tpu.memory_space<vmem>>, vector<1x8xf32>
    tpu.vector_store %arg4[%c0_10, %c0_11], %28 {strides = array<i32>} : memref<1x8xf32, #tpu.memory_space<vmem>>, vector<1x8xf32>,
    %c0_12 = arith.constant 0 : index
    %c0_13 = arith.constant 0 : index
    %30 = vector.load %arg3[%c0_12, %c0_13] : memref<1x8xf32, #tpu.memory_space<vmem>>, vector<1x8xf32>
    tpu.vector_store %arg3[%c0_12, %c0_13], %18 {strides = array<i32>} : memref<1x8xf32, #tpu.memory_space<vmem>>, vector<1x8xf32>,
    %c8_i32 = arith.constant 8 : i32
    %31 = arith.muli %arg0, %c8_i32 : i32
    %32 = tpu.iota {dimensions = array<i32: 0>} : vector<8x1xi32>
    %33 = vector.broadcast %31 : i32 to vector<8x1xi32>
    %34 = arith.addi %33, %32 : vector<8x1xi32>
    %c8_i32_14 = arith.constant 8 : i32
    %35 = vector.broadcast %c8_i32_14 : i32 to vector<8x1xi32>
    %36 = arith.cmpi slt, %34, %35 : vector<8x1xi32>
    %c0_15 = arith.constant 0 : index
    %c0_16 = arith.constant 0 : index
    %37 = vector.load %arg6[%c0_15, %c0_16] : memref<1x1xf32, #tpu.memory_space<vmem>>, vector<1x1xf32>
    %cst_17 = arith.constant 0.000000e+00 : f32
    %38 = vector.broadcast %cst_17 : f32 to vector<8x1xf32>
    %39 = arith.select %36, %14, %38 : vector<8x1xi1>, vector<8x1xf32>
    %40 = vector.shape_cast %39 : vector<8x1xf32> to vector<1x8x1xf32>
    %cst_18 = arith.constant dense<0.000000e+00> : vector<1xf32>
    %41 = vector.multi_reduction <add>, %40, %cst_18 [1, 2] : vector<1x8x1xf32> to vector<1xf32>
    %42 = vector.shape_cast %41 : vector<1xf32> to vector<1x1x1xf32>
    %43 = vector.extract %42[0, 0, 0] : f32 from vector<1x1x1xf32>
    %44 = vector.broadcast %43 : f32 to vector<1x1xf32>
    %45 = arith.addf %37, %44 : vector<1x1xf32>
    %c0_19 = arith.constant 0 : index
    %c0_20 = arith.constant 0 : index
    %46 = vector.load %arg6[%c0_19, %c0_20] : memref<1x1xf32, #tpu.memory_space<vmem>>, vector<1x1xf32>
    tpu.vector_store %arg6[%c0_19, %c0_20], %45 {strides = array<i32>} : memref<1x1xf32, #tpu.memory_space<vmem>>, vector<1x1xf32>,
    %c8_i32_21 = arith.constant 8 : i32
    %47 = arith.cmpi slt, %31, %c8_i32_21 : i32
    %48 = arith.extui %47 : i1 to i32
    %c0_i32_22 = arith.constant 0 : i32
    %49 = arith.cmpi ne, %48, %c0_i32_22 : i32
    scf.if %49 {
      %53 = tpu.iota {dimensions = array<i32: 1>} : vector<8x8xi32>
      %54 = vector.broadcast %34 : vector<8x1xi32> to vector<8x8xi32>
      %55 = arith.cmpi eq, %53, %54 : vector<8x8xi32>
      %56 = vector.broadcast %36 : vector<8x1xi1> to vector<8x8xi1>
      %57 = arith.andi %55, %56 : vector<8x8xi1>
      %c0_25 = arith.constant 0 : index
      %c0_26 = arith.constant 0 : index
      %58 = vector.load %arg5[%c0_25, %c0_26] : memref<1x1xf32, #tpu.memory_space<vmem>>, vector<1x1xf32>
      %cst_27 = arith.constant 0.000000e+00 : f32
      %59 = vector.broadcast %cst_27 : f32 to vector<8x8xf32>
      %60 = arith.select %57, %5, %59 : vector<8x8xi1>, vector<8x8xf32>
      %61 = vector.shape_cast %60 : vector<8x8xf32> to vector<1x8x8xf32>
      %cst_28 = arith.constant dense<0.000000e+00> : vector<1xf32>
      %62 = vector.multi_reduction <add>, %61, %cst_28 [1, 2] : vector<1x8x8xf32> to vector<1xf32>
      %63 = vector.shape_cast %62 : vector<1xf32> to vector<1x1x1xf32>
      %64 = vector.extract %63[0, 0, 0] : f32 from vector<1x1x1xf32>
      %65 = vector.broadcast %64 : f32 to vector<1x1xf32>
      %66 = arith.addf %58, %65 : vector<1x1xf32>
      %c0_29 = arith.constant 0 : index
      %c0_30 = arith.constant 0 : index
      %67 = vector.load %arg5[%c0_29, %c0_30] : memref<1x1xf32, #tpu.memory_space<vmem>>, vector<1x1xf32>
      tpu.vector_store %arg5[%c0_29, %c0_30], %66 {strides = array<i32>} : memref<1x1xf32, #tpu.memory_space<vmem>>, vector<1x1xf32>,
    } else {
    }
    %c0_i32_23 = arith.constant 0 : i32
    %50 = arith.cmpi eq, %arg0, %c0_i32_23 : i32
    %51 = arith.extui %50 : i1 to i32
    %c0_i32_24 = arith.constant 0 : i32
    %52 = arith.cmpi ne, %51, %c0_i32_24 : i32
    scf.if %52 {
      %c0_25 = arith.constant 0 : index
      %c0_26 = arith.constant 0 : index
      %53 = vector.load %arg3[%c0_25, %c0_26] : memref<1x8xf32, #tpu.memory_space<vmem>>, vector<1x8xf32>
      %c0_27 = arith.constant 0 : index
      %c0_28 = arith.constant 0 : index
      %54 = vector.load %arg4[%c0_27, %c0_28] : memref<1x8xf32, #tpu.memory_space<vmem>>, vector<1x8xf32>
      %55 = math.log %54 : vector<1x8xf32>
      %56 = arith.addf %53, %55 : vector<1x8xf32>
      %57 = tpu.iota {dimensions = array<i32: 1>} : vector<1x8xi32>
      %c8_i32_29 = arith.constant 8 : i32
      %58 = vector.broadcast %c8_i32_29 : i32 to vector<1x8xi32>
      %59 = arith.cmpi slt, %57, %58 : vector<1x8xi32>
      %cst_30 = arith.constant 0.000000e+00 : f32
      %60 = vector.broadcast %cst_30 : f32 to vector<1x8xf32>
      %61 = arith.select %59, %56, %60 : vector<1x8xi1>, vector<1x8xf32>
      %62 = vector.shape_cast %61 : vector<1x8xf32> to vector<1x1x8xf32>
      %cst_31 = arith.constant dense<0.000000e+00> : vector<1xf32>
      %63 = vector.multi_reduction <add>, %62, %cst_31 [1, 2] : vector<1x1x8xf32> to vector<1xf32>
      %64 = vector.shape_cast %63 : vector<1xf32> to vector<1x1x1xf32>
      %65 = vector.extract %64[0, 0, 0] : f32 from vector<1x1x1xf32>
      %c0_32 = arith.constant 0 : index
      %c0_33 = arith.constant 0 : index
      %66 = vector.load %arg5[%c0_32, %c0_33] : memref<1x1xf32, #tpu.memory_space<vmem>>, vector<1x1xf32>
      %67 = vector.shape_cast %66 : vector<1x1xf32> to vector<1x1x1xf32>
      %cst_34 = arith.constant dense<0.000000e+00> : vector<1xf32>
      %68 = vector.multi_reduction <add>, %67, %cst_34 [1, 2] : vector<1x1x1xf32> to vector<1xf32>
      %69 = vector.shape_cast %68 : vector<1xf32> to vector<1x1x1xf32>
      %70 = vector.extract %69[0, 0, 0] : f32 from vector<1x1x1xf32>
      %c0_35 = arith.constant 0 : index
      %c0_36 = arith.constant 0 : index
      %71 = vector.load %arg6[%c0_35, %c0_36] : memref<1x1xf32, #tpu.memory_space<vmem>>, vector<1x1xf32>
      %72 = vector.shape_cast %71 : vector<1x1xf32> to vector<1x1x1xf32>
      %cst_37 = arith.constant dense<0.000000e+00> : vector<1xf32>
      %73 = vector.multi_reduction <add>, %72, %cst_37 [1, 2] : vector<1x1x1xf32> to vector<1xf32>
      %74 = vector.shape_cast %73 : vector<1xf32> to vector<1x1x1xf32>
      %75 = vector.extract %74[0, 0, 0] : f32 from vector<1x1x1xf32>
      %76 = arith.subf %75, %70 : f32
      %cst_38 = arith.constant 1.250000e-01 : f32
      %77 = arith.mulf %76, %cst_38 : f32
      %78 = arith.subf %65, %70 : f32
      %cst_39 = arith.constant 1.250000e-01 : f32
      %79 = arith.mulf %78, %cst_39 : f32
      %80 = arith.addf %77, %79 : f32
      %c0_40 = arith.constant 0 : index
      %c0_41 = arith.constant 0 : index
      %81 = memref.load %arg2[%c0_40, %c0_41] : memref<1x1xf32, #tpu.memory_space<smem>>
      memref.store %80, %arg2[%c0_40, %c0_41] : memref<1x1xf32, #tpu.memory_space<smem>>
    } else {
    }
    return
  }
  func.func @transform_0(%arg0: i32) -> (i32, i32) {
    %c0_i32 = arith.constant 0 : i32
    %c0_i32_0 = arith.constant 0 : i32
    return %arg0, %c0_i32 : i32, i32
  }
  func.func @transform_1(%arg0: i32) -> (i32, i32) {
    %c0_i32 = arith.constant 0 : i32
    %c0_i32_0 = arith.constant 0 : i32
    %c0_i32_1 = arith.constant 0 : i32
    return %c0_i32, %c0_i32_0 : i32, i32
  }
}

</mosaic_0001>

<llo_original>
// kernel: tpu_custom_call.1
$region0: #{tpu_custom_call.1}
  #allocation0 [shape = 'u32[]', space=smem, size = 0x4, offset = 0x4, fixed_abs, tag = 'smem constant byte address 0x4 - core index']
  #allocation1 [shape = 'u32[144,128]{1,0:T(1,128)}', space=vmem, size = 0x12000, scoped, tag = 'internal scratch']
  #allocation2 [shape = 'f32[1,8]{1,0:T(1,128)}', space=vmem, size = 0x200, scoped, tag = 'scratch operand']
  #allocation3 [shape = 'f32[1,8]{1,0:T(1,128)}', space=vmem, size = 0x200, scoped, tag = 'scratch operand']
  #allocation4 [shape = 'f32[1,1]{1,0:T(1,128)}', space=vmem, size = 0x200, scoped, tag = 'scratch operand']
  #allocation5 [shape = 'f32[1,1]{1,0:T(1,128)}', space=vmem, size = 0x200, scoped, tag = 'scratch operand']
  %s0 = inlined_call_operand.hbm [shape: f32[8,8], index: 0, kind: input, shape index: {}]
  %s1 = inlined_call_operand.hbm [shape: f32[1,1], index: 1, kind: output, shape index: {}]
  %s2 = sld [smem:[#allocation0]]
  $region30: #{tpu_custom_call.1} parent=0
    _
  %s4 = ssub.s32 1, %s2
  %s5 = scalar_select 0, %s4, %s2
  $region1: #{tpu_custom_call.1} parent=0
    #allocation6 [shape = 'u8[4096]{0}', space=vmem, size = 0x1000, scoped, tag = 'input window, operand 0, single buffered']
    #allocation7 [shape = 's32[1]{0}', space=sflag, size = 0x4, scoped, tag = 'scoped memory for tpu_custom_call.1']
    #allocation8 [shape = 's32[1]{0}', space=sflag, size = 0x4, scoped, tag = 'scoped memory for tpu_custom_call.1']
    #allocation9 [shape = 'u8[512]{0}', space=smem, size = 0x200, scoped, tag = 'output window, operand 0, single buffered']
    %6 = vsyncpa [#allocation7], 0
    %7 = vsyncpa [#allocation8], 0
    // Predicated region
    $region2: #{tpu_custom_call.1} parent=1 // pred_check
      _
    $region3: #{tpu_custom_call.1} parent=1 // pred_check_branch
      %9 = sbr.rel (0) target = $region5
    $region4: #{tpu_custom_call.1} parent=1 // pred_region
      %s11 = ssub.s32 128, 128
      %12 = vsyncadd [#allocation7], %s11
      %s14 = sshll.u32 [#allocation6], 4
      %s15 = int_to_ptr.vmem [resolvable:$true] %s14
      %17 = dma.hbm_to_vmem [thread:$0]  %s0, 128, %s15, [#allocation7]
    $region5: #{tpu_custom_call.1} parent=1 // pred_fallthru
      _
    // Predicated region
    $region6: #{tpu_custom_call.1} parent=1 // pred_check
      _
    $region7: #{tpu_custom_call.1} parent=1 // pred_check_branch
      %19 = sbr.rel (0) target = $region9
    $region8: #{tpu_custom_call.1} parent=1 // pred_region
      %20 = dma.done [#allocation7], 128
    $region9: #{tpu_custom_call.1} parent=1 // pred_fallthru
      _
    %p21 = scmp.eq.s32.totalorder 0, 0
    // Predicated region
    $region10: #{tpu_custom_call.1} parent=1 // pred_check
      %p22 = pneg %p21
    $region11: #{tpu_custom_call.1} parent=1 // pred_check_branch
      %24 = sbr.rel (%p22) target = $region13
    $region12: #{tpu_custom_call.1} parent=1 // pred_region
      %vm25 = vcmask 57344
      %26 = vst.msk [vmem:[#allocation2] sm:$0x1] %vm25, -1e+30
      %27 = vst.msk [vmem:[#allocation3] sm:$0x1] %vm25, 0.0
      %vm28 = vcmask 0
      %29 = vst.msk [vmem:[#allocation4] sm:$0x1] %vm28, 0.0
      %30 = vst.msk [vmem:[#allocation5] sm:$0x1] %vm28, 0.0
    $region13: #{tpu_custom_call.1} parent=1 // pred_fallthru
      _
    %v31 = vld [vmem:[#allocation6] sm:$0xff]
    %v32 = vmul.f32 %v31, 20.0
    %vm33 = vcmask 64512
    %v34 = vsel %vm33, %v32, -inf
    %35 = vmax.xlane.f32.xlu0 %v34
    %v36 = vpop.xlane.xlu0 %35
    %v37 = vsub.f32 %v32, %v36
    %v38 = vmul.f32 %v37, 1.442695
    %v39 = vpow.pop %v38
    %v40 = vsel %vm33, %v39, 0.0
    %41 = vadd.xlane.f32.xlu0 %v40
    %v42 = vpop.xlane.xlu0 %41
    %v43 = vlog2.pop %v42
    %v44 = vmul.f32 %v43, 0.6931472
    %v45 = vadd.f32 %v36, %v44
    %v46 = vld [vmem:[#allocation2] sm:$0x1]
    %v47 = vrot.slane %v34, 4
    %v48 = vmax.f32 %v34, %v47
    %v49 = vrot.slane %v48, 2
    %v50 = vmax.f32 %v48, %v49
    %v51 = vrot.slane %v50, 1
    %v52 = vmax.f32 %v50, %v51
    %v53 = vmax.f32 %v46, %v52
    %v54 = vld [vmem:[#allocation3] sm:$0x1]
    %v55 = vsub.f32 %v46, %v53
    %v56 = vmul.f32 %v55, 1.442695
    %v57 = vpow.pop %v56
    %v58 = vmul.f32 %v54, %v57
    %v60 = vlaneseq
    %v61 = vshrl.u32 %v60, 7
    %v62 = vsub.s32 0, %v61
    %v63 = vrot.slane %v53, %v62
    %v65 = vsub.f32 %v32, %v63
    %v66 = vmul.f32 %v65, 1.442695
    %v67 = vpow.pop %v66
    %v68 = vsel %vm33, %v67, 0.0
    %v69 = vrot.slane %v68, 4
    %v70 = vadd.f32 %v68, %v69
    %v71 = vrot.slane %v70, 2
    %v72 = vadd.f32 %v70, %v71
    %v73 = vrot.slane %v72, 1
    %v74 = vadd.f32 %v72, %v73
    %v75 = vadd.f32 %v58, %v74
    %vm76 = vcmask 57344
    %77 = vst.msk [vmem:[#allocation3] sm:$0x1] %vm76, %v75
    %78 = vst.msk [vmem:[#allocation2] sm:$0x1] %vm76, %v53
    %s79 = smul.u32 0, 8
    %v80 = vlaneseq
    %v81 = vshrl.u32 %v80, 7
    %v82 = vstv %s79
    %v83 = vadd.s32 %v82, %v81
    %vm84 = vcmp.lt.s32.totalorder %v83, 8
    %v85 = vld [vmem:[#allocation5] sm:$0x1]
    %v86 = vsel %vm84, %v45, 0.0
    %vm87 = vcmask 7168
    %v88 = vsel %vm87, %v86, 0.0
    %89 = vadd.xlane.f32.xlu0 %v88
    %v90 = vpop.xlane.xlu0 %89
    %v91 = vrot.slane %v90, 4
    %v92 = vadd.f32 %v90, %v91
    %v93 = vrot.slane %v92, 2
    %v94 = vadd.f32 %v92, %v93
    %v95 = vrot.slane %v94, 1
    %v96 = vadd.f32 %v94, %v95
    %s97 = vtos %v96
    %v98 = vstv %s97
    %v99 = vadd.f32 %v85, %v98
    %vm100 = vcmask 0
    %101 = vst.msk [vmem:[#allocation5] sm:$0x1] %vm100, %v99
    %p102 = scmp.lt.s32.totalorder %s79, 8
    // Predicated region
    $region14: #{tpu_custom_call.1} parent=1 // pred_check
      %p103 = pneg %p102
    $region15: #{tpu_custom_call.1} parent=1 // pred_check_branch
      %105 = sbr.rel (%p103) target = $region17
    $region16: #{tpu_custom_call.1} parent=1 // pred_region
      %v106 = vlaneseq
      %v107 = vand.u32 %v106, 127
      %vm108 = vcmp.eq.s32.totalorder %v107, %v83
      %v109 = vsel %vm84, 1, 0
      %vm110 = vcmp.eq.s32.totalorder %v109, 1
      %vm111 = vmand %vm108, %vm110
      %v112 = vld [vmem:[#allocation4] sm:$0x1]
      %v113 = vsel %vm111, %v32, 0.0
      %v114 = vsel %vm33, %v113, 0.0
      %115 = vadd.xlane.f32.xlu0 %v114
      %v116 = vpop.xlane.xlu0 %115
      %v117 = vrot.slane %v116, 4
      %v118 = vadd.f32 %v116, %v117
      %v119 = vrot.slane %v118, 2
      %v120 = vadd.f32 %v118, %v119
      %v121 = vrot.slane %v120, 1
      %v122 = vadd.f32 %v120, %v121
      %s123 = vtos %v122
      %v124 = vstv %s123
      %v125 = vadd.f32 %v112, %v124
      %126 = vst.msk [vmem:[#allocation4] sm:$0x1] %vm100, %v125
    $region17: #{tpu_custom_call.1} parent=1 // pred_fallthru
      _
    // Predicated region
    $region18: #{tpu_custom_call.1} parent=1 // pred_check
      %p127 = pneg %p21
    $region19: #{tpu_custom_call.1} parent=1 // pred_check_branch
      %129 = sbr.rel (%p127) target = $region21
    $region20: #{tpu_custom_call.1} parent=1 // pred_region
      %v130 = vld [vmem:[#allocation2] sm:$0x1]
      %v131 = vld [vmem:[#allocation3] sm:$0x1]
      %v132 = vlog2.pop %v131
      %v133 = vmul.f32 %v132, 0.6931472
      %v134 = vadd.f32 %v130, %v133
      %v135 = vlaneseq
      %v136 = vand.u32 %v135, 127
      %vm137 = vcmp.lt.s32.totalorder %v136, 8
      %v138 = vsel %vm137, %v134, 0.0
      %v139 = vsel %vm76, %v138, 0.0
      %140 = vadd.xlane.f32.xlu0 %v139
      %v141 = vpop.xlane.xlu0 %140
      %v142 = vrot.slane %v141, 4
      %v143 = vadd.f32 %v141, %v142
      %v144 = vrot.slane %v143, 2
      %v145 = vadd.f32 %v143, %v144
      %v146 = vrot.slane %v145, 1
      %v147 = vadd.f32 %v145, %v146
      %s148 = vtos %v147
      %v149 = vld [vmem:[#allocation4] sm:$0x1]
      %v150 = vadd.f32 %v149, 0.0
      %s151 = vtos %v150
      %v152 = vld [vmem:[#allocation5] sm:$0x1]
      %v153 = vadd.f32 %v152, 0.0
      %s154 = vtos %v153
      %s155 = ssub.f32 %s154, %s151
      %s156 = smul.f32 %s155, 0.125
      %s157 = ssub.f32 %s148, %s151
      %s158 = smul.f32 %s157, 0.125
      %s159 = sadd.f32 %s156, %s158
      %s160 = scalar_lea.smem [#allocation9], 0
      %161 = sst [smem:[%s160]] %s159
    $region21: #{tpu_custom_call.1} parent=1 // pred_fallthru
      _
    // Predicated region
    $region22: #{tpu_custom_call.1} parent=1 // pred_check
      _
    $region23: #{tpu_custom_call.1} parent=1 // pred_check_branch
      %163 = sbr.rel (0) target = $region25
    $region24: #{tpu_custom_call.1} parent=1 // pred_region
      %s165 = ssub.s32 16, 16
      %166 = vsyncadd [#allocation8], %s165
      %169 = dma.smem_to_hbm [#allocation9], 16, %s1, [#allocation8]
    $region25: #{tpu_custom_call.1} parent=1 // pred_fallthru
      _
    // Predicated region
    $region26: #{tpu_custom_call.1} parent=1 // pred_check
      _
    $region27: #{tpu_custom_call.1} parent=1 // pred_check_branch
      %171 = sbr.rel (0) target = $region29
    $region28: #{tpu_custom_call.1} parent=1 // pred_region
      %172 = dma.done [#allocation8], 16
    $region29: #{tpu_custom_call.1} parent=1 // pred_fallthru
      _
    %173 = sfence
    %174 = vsyncpa [#allocation7], 1
    %175 = vsyncpa [#allocation8], 1

</llo_original>
